<compile_context>
chip_gen: v5e
topology: v5e:2x2
jax: 0.10.0
libtpu: 0.0.40
codegen_flags: <defaults>
</compile_context>

<pallas_src>
import functools

import jax
import jax.numpy as jnp
from jax import lax
from jax.experimental import pallas as pl
from jax.experimental.pallas import tpu as pltpu


# ----------------------------- fused Pallas kernel -----------------------------

def _shuffle_xception_kernel(x_ref, p_ref, o_ref, *,
                             offs, n, hw, img_w, inp, mid, outputs, cmid):
    # x_ref: (n, inp, 2*hw)  lanes [0:hw) = even (pass-through) channel, [hw:2hw) = odd (branch).
    # p_ref: (R, L) packed parameter slab (static row offsets in `offs`).
    # o_ref: (n, inp+outputs, hw)  -> free-views to NCHW outside.
    L = n * hw

    # channel_shuffle: odd channels of each sample, lane-concatenated -> (inp, L).
    xb = jnp.concatenate([x_ref[i, :, hw:2 * hw] for i in range(n)], axis=1)

    def tap(base, k):                                  # (C, L) mask- & BN-folded tap plane
        return p_ref[base + 8 * k: base + 8 * (k + 1), :]

    def dw3x3(x, base):
        # 3x3 depthwise conv + BN scale; boundary masks pre-folded into the taps,
        # BN bias absorbed into the following 1x1-conv bias.
        acc = x * tap(base, 4)                         # centre tap
        k = 0
        for dy in (-1, 0, 1):
            for dx in (-1, 0, 1):
                if dy == 0 and dx == 0:
                    k += 1
                    continue
                s = dy * img_w + dx                    # neighbour offset in flattened (n,h,w)
                acc = acc + pltpu.roll(x, shift=(-s) % L, axis=1) * tap(base, k)
                k += 1
        return acc

    def pw1x1_hs(x, wbase, bbase, cout, cin):
        # 1x1 conv + folded BN + hard-swish on the VPU: cin FMAs with lane-replicated
        # weight planes and (1, L) sublane-broadcast rows of x.  No MXU round-trip.
        acc = p_ref[bbase: bbase + cout, :]            # lane-replicated bias (cout, L)
        for ci in range(cin):
            acc = acc + p_ref[wbase + ci * 8: wbase + ci * 8 + cout, :] * x[ci:ci + 1, :]
        return acc * (jnp.clip(acc + 3.0, 0.0, 6.0) * (1.0 / 6.0))

    y = dw3x3(xb, offs['dw1'])
    y = pw1x1_hs(y, offs['pw1_w'], offs['pw1_b'], mid, inp)
    y = dw3x3(y, offs['dw2'])
    y = pw1x1_hs(y, offs['pw2_w'], offs['pw2_b'], mid, mid)
    y = dw3x3(y, offs['dw3'])
    y = pw1x1_hs(y, offs['pw3_w'], offs['pw3_b'], outputs, mid)

    # SELayer parameters (BN scale folded into se_w1).
    se_w1 = p_ref[offs['se_w1']: offs['se_w1'] + outputs, 0:cmid]   # (C, Cmid)
    se_b = p_ref[offs['se_b']: offs['se_b'] + 1, 0:cmid]            # (1, Cmid)
    se_w2 = p_ref[offs['se_w2']: offs['se_w2'] + outputs, 0:cmid]   # (C, Cmid)

    for i in range(n):
        # Per-sample SE gate (AdaptiveAvgPool2d pools each sample separately).
        yi = y[:, i * hw:(i + 1) * hw]                               # (outputs, hw)
        pooled = jnp.sum(yi, axis=1, keepdims=True) * (1.0 / hw)     # (outputs, 1)
        a1 = jnp.maximum(jnp.sum(se_w1 * pooled, axis=0, keepdims=True) + se_b, 0.0)
        a2 = jnp.sum(se_w2 * a1, axis=1, keepdims=True)              # (outputs, 1)
        gate = jnp.clip(a2 + 3.0, 0.0, 6.0) * (1.0 / 6.0)
        o_ref[i, 0:inp, :] = x_ref[i, :, 0:hw]                       # pass-through (even) half
        o_ref[i, inp:inp + outputs, :] = yi * gate                   # SE-gated branch half


# ----------------------------- host-side parameter prep ------------------------

def fold_bn(gamma, beta, mean, var, eps=1e-5):
    scale = gamma / jnp.sqrt(var + eps)
    bias = beta - mean * scale
    return scale, bias


def make_bn(key, c):
    k1, k2, k3, k4 = jax.random.split(key, 4)
    gamma = jax.random.uniform(k1, (c,), jnp.float32, 0.5, 1.5)
    beta = 0.1 * jax.random.normal(k2, (c,), jnp.float32)
    mean = 0.1 * jax.random.normal(k3, (c,), jnp.float32)
    var = jax.random.uniform(k4, (c,), jnp.float32, 0.5, 1.5)
    return fold_bn(gamma, beta, mean, var)


def init_params(key, inp, oup):
    mid = oup // 2
    outputs = oup - inp
    keys = iter(jax.random.split(key, 24))

    def conv(shape):
        return 0.1 * jax.random.normal(next(keys), shape, jnp.float32)

    p = {}
    p['dw1_w'] = conv((inp, 1, 3, 3));        p['bn1'] = make_bn(next(keys), inp)
    p['pw1_w'] = conv((mid, inp, 1, 1));      p['bn2'] = make_bn(next(keys), mid)
    p['dw2_w'] = conv((mid, 1, 3, 3));        p['bn3'] = make_bn(next(keys), mid)
    p['pw2_w'] = conv((mid, mid, 1, 1));      p['bn4'] = make_bn(next(keys), mid)
    p['dw3_w'] = conv((mid, 1, 3, 3));        p['bn5'] = make_bn(next(keys), mid)
    p['pw3_w'] = conv((outputs, mid, 1, 1));  p['bn6'] = make_bn(next(keys), outputs)
    p['se_w1'] = conv((outputs // 4, outputs, 1, 1))
    p['se_bn'] = make_bn(next(keys), outputs // 4)
    p['se_w2'] = conv((outputs, outputs // 4, 1, 1))
    return p


def make_dw_masks(N, H, W):
    # mask[k, l] = 1 if the (dy, dx) neighbour of flattened position l is inside its image.
    l = jnp.arange(N * H * W)
    h = (l % (H * W)) // W
    w = l % W
    rows = []
    for dy in (-1, 0, 1):
        for dx in (-1, 0, 1):
            valid = (h + dy >= 0) & (h + dy < H) & (w + dx >= 0) & (w + dx < W)
            rows.append(valid.astype(jnp.float32))
    return jnp.stack(rows, axis=0)                       # (9, N*H*W)


def prepare_fused_params(p, N, H, W):
    """One-time: fold BN + masks into weights and pack everything into one (R, L) slab."""
    HW = H * W
    L = N * HW
    masks = make_dw_masks(N, H, W)                       # (9, L)

    blocks, offs = [], {}

    def add(name, arr):                                  # pad to 8-row / L-lane aligned block
        arr = jnp.asarray(arr, jnp.float32)
        r, c = arr.shape
        blk = jnp.zeros((r + ((-r) % 8), L), jnp.float32).at[:r, :c].set(arr)
        offs[name] = sum(b.shape[0] for b in blocks)
        blocks.append(blk)

    def dw_block(wt, bn):                                # (9*C, L) mask- & BN-scale-folded taps
        s, _ = bn
        t = wt[:, 0].reshape(wt.shape[0], 9) * s[:, None]
        return jnp.concatenate([t[:, k:k + 1] * masks[k:k + 1, :] for k in range(9)], axis=0)

    def pw_blocks(wt, bn, dw_bias):
        s, b = bn
        wf = wt[:, :, 0, 0] * s[:, None]                 # (Cout, Cin) BN-scale folded
        bf = jnp.sum(wf * dw_bias[None, :], axis=1) + b  # absorb preceding dw BN bias (exact f32)
        wrep = jnp.concatenate(                          # per-ci lane-replicated weight planes
            [jnp.broadcast_to(wf[:, ci][:, None], (wf.shape[0], L)) for ci in range(wf.shape[1])],
            axis=0)
        brep = jnp.broadcast_to(bf[:, None], (bf.shape[0], L))
        return wrep, brep

    add('dw1', dw_block(p['dw1_w'], p['bn1']))
    w, b = pw_blocks(p['pw1_w'], p['bn2'], p['bn1'][1]); add('pw1_w', w); add('pw1_b', b)
    add('dw2', dw_block(p['dw2_w'], p['bn3']))
    w, b = pw_blocks(p['pw2_w'], p['bn4'], p['bn3'][1]); add('pw2_w', w); add('pw2_b', b)
    add('dw3', dw_block(p['dw3_w'], p['bn5']))
    w, b = pw_blocks(p['pw3_w'], p['bn6'], p['bn5'][1]); add('pw3_w', w); add('pw3_b', b)

    se_s, se_b = p['se_bn']
    add('se_w1', jnp.transpose(p['se_w1'][:, :, 0, 0] * se_s[:, None]))   # (C, Cmid), BN folded
    add('se_b', se_b[None, :])                                            # (1, Cmid)
    add('se_w2', p['se_w2'][:, :, 0, 0])                                  # (C, Cmid)

    slab = jnp.concatenate(blocks, axis=0)               # (R, L) ~ 230 KB
    meta = dict(offs=offs, mid=p['pw1_w'].shape[0], outputs=p['pw3_w'].shape[0],
                cmid=p['se_w1'].shape[0])
    return slab, meta


# ----------------------------- Pallas-backed forward ---------------------------

def shuffle_xception_pallas(x_nchw, slab, meta):
    N, C, H, W = x_nchw.shape
    HW = H * W
    inp = C // 2
    mid, outputs, cmid = meta['mid'], meta['outputs'], meta['cmid']
    oup = inp + outputs
    assert inp == 8 and mid == 8 and outputs == 8, "slab packing assumes 8-row channel blocks"
    assert (N * HW) % 128 == 0

    # Free view: (N, C, H, W) -> (N, C//2, 2*H*W).  Lanes [0:HW) of each row = even channel
    # (pass-through half of channel_shuffle), lanes [HW:2*HW) = odd channel (branch input).
    x_view = x_nchw.reshape(N, inp, 2 * HW)

    flops = 2 * N * HW * (mid * inp + mid * mid + outputs * mid + 9 * (inp + mid + mid))
    bytes_accessed = 4 * (x_view.size + N * oup * HW + slab.size)

    out = pl.pallas_call(
        functools.partial(_shuffle_xception_kernel, offs=meta['offs'], n=N, hw=HW,
                          img_w=W, inp=inp, mid=mid, outputs=outputs, cmid=cmid),
        out_shape=jax.ShapeDtypeStruct((N, oup, HW), jnp.float32),
        cost_estimate=pl.CostEstimate(flops=flops, transcendentals=0,
                                      bytes_accessed=bytes_accessed),
    )(x_view, slab)

    return out.reshape(N, oup, H, W)                     # free view back to NCHW


# ----------------------------- plain-JAX reference -----------------------------

def _conv(x, w, stride=1, pad=0, groups=1):
    return lax.conv_general_dilated(
        x, w, (stride, stride), ((pad, pad), (pad, pad)),
        feature_group_count=groups,
        dimension_numbers=('NCHW', 'OIHW', 'NCHW'),
        precision=lax.Precision.HIGHEST)


def _bn(x, bn):
    s, b = bn
    return x * s[None, :, None, None] + b[None, :, None, None]


def _hs(x):
    return x * (jnp.clip(x + 3.0, 0.0, 6.0) / 6.0)


def channel_shuffle_ref(x):
    b, c, h, w = x.shape
    assert c % 4 == 0
    x = x.reshape(b * c // 2, 2, h * w)
    x = jnp.transpose(x, (1, 0, 2))
    x = x.reshape(2, -1, c // 2, h, w)
    return x[0], x[1]


def shuffle_xception_ref(x_nchw, p, inp):
    x_proj, x = channel_shuffle_ref(x_nchw)
    mid = p['pw1_w'].shape[0]
    y = _bn(_conv(x, p['dw1_w'], 1, 1, groups=inp), p['bn1'])
    y = _hs(_bn(_conv(y, p['pw1_w']), p['bn2']))
    y = _bn(_conv(y, p['dw2_w'], 1, 1, groups=mid), p['bn3'])
    y = _hs(_bn(_conv(y, p['pw2_w']), p['bn4']))
    y = _bn(_conv(y, p['dw3_w'], 1, 1, groups=mid), p['bn5'])
    y = _hs(_bn(_conv(y, p['pw3_w']), p['bn6']))
    # SELayer (per-sample adaptive average pool)
    pooled = jnp.mean(y, axis=(2, 3), keepdims=True)
    a = jnp.maximum(_bn(_conv(pooled, p['se_w1']), p['se_bn']), 0.0)
    a = _conv(a, p['se_w2'])
    atten = jnp.clip(a + 3.0, 0.0, 6.0) / 6.0
    y = y * atten
    return jnp.concatenate([x_proj, y], axis=1)


# ----------------------------- main ---------------------------------------------

if __name__ == "__main__":
    key = jax.random.PRNGKey(0)
    kx, kp = jax.random.split(key)

    N, C, H, W = 2, 16, 8, 8          # old_x channels must be divisible by 4; N*H*W = 128 lanes
    inp = C // 2                      # stride=1 branch operates on half the channels
    oup = C                           # base_mid_channels = oup // 2 = 8, outputs = oup - inp = 8

    x = jax.random.normal(kx, (N, C, H, W), jnp.float32)
    params = init_params(kp, inp, oup)
    slab, meta = prepare_fused_params(params, N, H, W)   # BN/mask folding + packing, done once

    fwd = jax.jit(lambda xx: shuffle_xception_pallas(xx, slab, meta))
    out = jax.block_until_ready(fwd(x))
    ref = jax.block_until_ready(shuffle_xception_ref(x, params, inp))

    assert out.shape == (N, oup, H, W), out.shape
    err = float(jnp.max(jnp.abs(out - ref)))
    assert err < 1e-4, f"max abs err {err}"
    print("KERNEL_OK")
</pallas_src>

<mosaic_0001>
module attributes {stable_mosaic.version = 11 : i64} {
  func.func @_shuffle_xception_kernel(%arg0: memref<2x8x128xf32, #tpu.memory_space<vmem>>, %arg1: memref<456x128xf32, #tpu.memory_space<vmem>>, %arg2: memref<2x16x64xf32, #tpu.memory_space<vmem>>) attributes {dimension_semantics = [], scalar_prefetch = 0 : i64, scratch_operands = 0 : i64, tpu.core_type = #tpu.core_type<tc>} {
    %c0 = arith.constant 0 : index
    %c0_0 = arith.constant 0 : index
    %c64 = arith.constant 64 : index
    %0 = vector.load %arg0[%c0, %c0_0, %c64] : memref<2x8x128xf32, #tpu.memory_space<vmem>>, vector<1x8x64xf32>
    %1 = vector.shape_cast %0 : vector<1x8x64xf32> to vector<8x64xf32>
    %c1 = arith.constant 1 : index
    %c0_1 = arith.constant 0 : index
    %c64_2 = arith.constant 64 : index
    %2 = vector.load %arg0[%c1, %c0_1, %c64_2] : memref<2x8x128xf32, #tpu.memory_space<vmem>>, vector<1x8x64xf32>
    %3 = vector.shape_cast %2 : vector<1x8x64xf32> to vector<8x64xf32>
    %4 = tpu.concatenate %1, %3 in 1 : vector<8x64xf32>, vector<8x64xf32> -> vector<8x128xf32>
    %c32 = arith.constant 32 : index
    %c0_3 = arith.constant 0 : index
    %5 = vector.load %arg1[%c32, %c0_3] : memref<456x128xf32, #tpu.memory_space<vmem>>, vector<8x128xf32>
    %6 = arith.mulf %4, %5 : vector<8x128xf32>
    %c9_i32 = arith.constant 9 : i32
    %7 = tpu.dynamic_rotate %4 by %c9_i32 dim 1 : vector<8x128xf32>, i32 -> vector<8x128xf32>
    %c0_4 = arith.constant 0 : index
    %c0_5 = arith.constant 0 : index
    %8 = vector.load %arg1[%c0_4, %c0_5] : memref<456x128xf32, #tpu.memory_space<vmem>>, vector<8x128xf32>
    %9 = arith.mulf %7, %8 : vector<8x128xf32>
    %10 = arith.addf %6, %9 : vector<8x128xf32>
    %c8_i32 = arith.constant 8 : i32
    %11 = tpu.dynamic_rotate %4 by %c8_i32 dim 1 : vector<8x128xf32>, i32 -> vector<8x128xf32>
    %c8 = arith.constant 8 : index
    %c0_6 = arith.constant 0 : index
    %12 = vector.load %arg1[%c8, %c0_6] : memref<456x128xf32, #tpu.memory_space<vmem>>, vector<8x128xf32>
    %13 = arith.mulf %11, %12 : vector<8x128xf32>
    %14 = arith.addf %10, %13 : vector<8x128xf32>
    %c7_i32 = arith.constant 7 : i32
    %15 = tpu.dynamic_rotate %4 by %c7_i32 dim 1 : vector<8x128xf32>, i32 -> vector<8x128xf32>
    %c16 = arith.constant 16 : index
    %c0_7 = arith.constant 0 : index
    %16 = vector.load %arg1[%c16, %c0_7] : memref<456x128xf32, #tpu.memory_space<vmem>>, vector<8x128xf32>
    %17 = arith.mulf %15, %16 : vector<8x128xf32>
    %18 = arith.addf %14, %17 : vector<8x128xf32>
    %c1_i32 = arith.constant 1 : i32
    %19 = tpu.dynamic_rotate %4 by %c1_i32 dim 1 : vector<8x128xf32>, i32 -> vector<8x128xf32>
    %c24 = arith.constant 24 : index
    %c0_8 = arith.constant 0 : index
    %20 = vector.load %arg1[%c24, %c0_8] : memref<456x128xf32, #tpu.memory_space<vmem>>, vector<8x128xf32>
    %21 = arith.mulf %19, %20 : vector<8x128xf32>
    %22 = arith.addf %18, %21 : vector<8x128xf32>
    %c127_i32 = arith.constant 127 : i32
    %23 = tpu.dynamic_rotate %4 by %c127_i32 dim 1 : vector<8x128xf32>, i32 -> vector<8x128xf32>
    %c40 = arith.constant 40 : index
    %c0_9 = arith.constant 0 : index
    %24 = vector.load %arg1[%c40, %c0_9] : memref<456x128xf32, #tpu.memory_space<vmem>>, vector<8x128xf32>
    %25 = arith.mulf %23, %24 : vector<8x128xf32>
    %26 = arith.addf %22, %25 : vector<8x128xf32>
    %c121_i32 = arith.constant 121 : i32
    %27 = tpu.dynamic_rotate %4 by %c121_i32 dim 1 : vector<8x128xf32>, i32 -> vector<8x128xf32>
    %c48 = arith.constant 48 : index
    %c0_10 = arith.constant 0 : index
    %28 = vector.load %arg1[%c48, %c0_10] : memref<456x128xf32, #tpu.memory_space<vmem>>, vector<8x128xf32>
    %29 = arith.mulf %27, %28 : vector<8x128xf32>
    %30 = arith.addf %26, %29 : vector<8x128xf32>
    %c120_i32 = arith.constant 120 : i32
    %31 = tpu.dynamic_rotate %4 by %c120_i32 dim 1 : vector<8x128xf32>, i32 -> vector<8x128xf32>
    %c56 = arith.constant 56 : index
    %c0_11 = arith.constant 0 : index
    %32 = vector.load %arg1[%c56, %c0_11] : memref<456x128xf32, #tpu.memory_space<vmem>>, vector<8x128xf32>
    %33 = arith.mulf %31, %32 : vector<8x128xf32>
    %34 = arith.addf %30, %33 : vector<8x128xf32>
    %c119_i32 = arith.constant 119 : i32
    %35 = tpu.dynamic_rotate %4 by %c119_i32 dim 1 : vector<8x128xf32>, i32 -> vector<8x128xf32>
    %c64_12 = arith.constant 64 : index
    %c0_13 = arith.constant 0 : index
    %36 = vector.load %arg1[%c64_12, %c0_13] : memref<456x128xf32, #tpu.memory_space<vmem>>, vector<8x128xf32>
    %37 = arith.mulf %35, %36 : vector<8x128xf32>
    %38 = arith.addf %34, %37 : vector<8x128xf32>
    %c136 = arith.constant 136 : index
    %c0_14 = arith.constant 0 : index
    %39 = vector.load %arg1[%c136, %c0_14] : memref<456x128xf32, #tpu.memory_space<vmem>>, vector<8x128xf32>
    %c72 = arith.constant 72 : index
    %c0_15 = arith.constant 0 : index
    %40 = vector.load %arg1[%c72, %c0_15] : memref<456x128xf32, #tpu.memory_space<vmem>>, vector<8x128xf32>
    %41 = vector.extract_strided_slice %38 {offsets = [0, 0], sizes = [1, 128], strides = [1, 1]} : vector<8x128xf32> to vector<1x128xf32>
    %42 = vector.broadcast %41 : vector<1x128xf32> to vector<8x128xf32>
    %43 = arith.mulf %40, %42 : vector<8x128xf32>
    %44 = arith.addf %39, %43 : vector<8x128xf32>
    %c80 = arith.constant 80 : index
    %c0_16 = arith.constant 0 : index
    %45 = vector.load %arg1[%c80, %c0_16] : memref<456x128xf32, #tpu.memory_space<vmem>>, vector<8x128xf32>
    %46 = vector.extract_strided_slice %38 {offsets = [1, 0], sizes = [1, 128], strides = [1, 1]} : vector<8x128xf32> to vector<1x128xf32>
    %47 = vector.broadcast %46 : vector<1x128xf32> to vector<8x128xf32>
    %48 = arith.mulf %45, %47 : vector<8x128xf32>
    %49 = arith.addf %44, %48 : vector<8x128xf32>
    %c88 = arith.constant 88 : index
    %c0_17 = arith.constant 0 : index
    %50 = vector.load %arg1[%c88, %c0_17] : memref<456x128xf32, #tpu.memory_space<vmem>>, vector<8x128xf32>
    %51 = vector.extract_strided_slice %38 {offsets = [2, 0], sizes = [1, 128], strides = [1, 1]} : vector<8x128xf32> to vector<1x128xf32>
    %52 = vector.broadcast %51 : vector<1x128xf32> to vector<8x128xf32>
    %53 = arith.mulf %50, %52 : vector<8x128xf32>
    %54 = arith.addf %49, %53 : vector<8x128xf32>
    %c96 = arith.constant 96 : index
    %c0_18 = arith.constant 0 : index
    %55 = vector.load %arg1[%c96, %c0_18] : memref<456x128xf32, #tpu.memory_space<vmem>>, vector<8x128xf32>
    %56 = vector.extract_strided_slice %38 {offsets = [3, 0], sizes = [1, 128], strides = [1, 1]} : vector<8x128xf32> to vector<1x128xf32>
    %57 = vector.broadcast %56 : vector<1x128xf32> to vector<8x128xf32>
    %58 = arith.mulf %55, %57 : vector<8x128xf32>
    %59 = arith.addf %54, %58 : vector<8x128xf32>
    %c104 = arith.constant 104 : index
    %c0_19 = arith.constant 0 : index
    %60 = vector.load %arg1[%c104, %c0_19] : memref<456x128xf32, #tpu.memory_space<vmem>>, vector<8x128xf32>
    %61 = vector.extract_strided_slice %38 {offsets = [4, 0], sizes = [1, 128], strides = [1, 1]} : vector<8x128xf32> to vector<1x128xf32>
    %62 = vector.broadcast %61 : vector<1x128xf32> to vector<8x128xf32>
    %63 = arith.mulf %60, %62 : vector<8x128xf32>
    %64 = arith.addf %59, %63 : vector<8x128xf32>
    %c112 = arith.constant 112 : index
    %c0_20 = arith.constant 0 : index
    %65 = vector.load %arg1[%c112, %c0_20] : memref<456x128xf32, #tpu.memory_space<vmem>>, vector<8x128xf32>
    %66 = vector.extract_strided_slice %38 {offsets = [5, 0], sizes = [1, 128], strides = [1, 1]} : vector<8x128xf32> to vector<1x128xf32>
    %67 = vector.broadcast %66 : vector<1x128xf32> to vector<8x128xf32>
    %68 = arith.mulf %65, %67 : vector<8x128xf32>
    %69 = arith.addf %64, %68 : vector<8x128xf32>
    %c120 = arith.constant 120 : index
    %c0_21 = arith.constant 0 : index
    %70 = vector.load %arg1[%c120, %c0_21] : memref<456x128xf32, #tpu.memory_space<vmem>>, vector<8x128xf32>
    %71 = vector.extract_strided_slice %38 {offsets = [6, 0], sizes = [1, 128], strides = [1, 1]} : vector<8x128xf32> to vector<1x128xf32>
    %72 = vector.broadcast %71 : vector<1x128xf32> to vector<8x128xf32>
    %73 = arith.mulf %70, %72 : vector<8x128xf32>
    %74 = arith.addf %69, %73 : vector<8x128xf32>
    %c128 = arith.constant 128 : index
    %c0_22 = arith.constant 0 : index
    %75 = vector.load %arg1[%c128, %c0_22] : memref<456x128xf32, #tpu.memory_space<vmem>>, vector<8x128xf32>
    %76 = vector.extract_strided_slice %38 {offsets = [7, 0], sizes = [1, 128], strides = [1, 1]} : vector<8x128xf32> to vector<1x128xf32>
    %77 = vector.broadcast %76 : vector<1x128xf32> to vector<8x128xf32>
    %78 = arith.mulf %75, %77 : vector<8x128xf32>
    %79 = arith.addf %74, %78 : vector<8x128xf32>
    %cst = arith.constant 3.000000e+00 : f32
    %80 = vector.broadcast %cst : f32 to vector<8x128xf32>
    %81 = arith.addf %79, %80 : vector<8x128xf32>
    %cst_23 = arith.constant 0.000000e+00 : f32
    %cst_24 = arith.constant 6.000000e+00 : f32
    %82 = vector.broadcast %cst_23 : f32 to vector<8x128xf32>
    %83 = arith.maximumf %82, %81 : vector<8x128xf32>
    %84 = vector.broadcast %cst_24 : f32 to vector<8x128xf32>
    %85 = arith.minimumf %84, %83 : vector<8x128xf32>
    %cst_25 = arith.constant 0.166666672 : f32
    %86 = vector.broadcast %cst_25 : f32 to vector<8x128xf32>
    %87 = arith.mulf %85, %86 : vector<8x128xf32>
    %88 = arith.mulf %79, %87 : vector<8x128xf32>
    %c176 = arith.constant 176 : index
    %c0_26 = arith.constant 0 : index
    %89 = vector.load %arg1[%c176, %c0_26] : memref<456x128xf32, #tpu.memory_space<vmem>>, vector<8x128xf32>
    %90 = arith.mulf %88, %89 : vector<8x128xf32>
    %c9_i32_27 = arith.constant 9 : i32
    %91 = tpu.dynamic_rotate %88 by %c9_i32_27 dim 1 : vector<8x128xf32>, i32 -> vector<8x128xf32>
    %c144 = arith.constant 144 : index
    %c0_28 = arith.constant 0 : index
    %92 = vector.load %arg1[%c144, %c0_28] : memref<456x128xf32, #tpu.memory_space<vmem>>, vector<8x128xf32>
    %93 = arith.mulf %91, %92 : vector<8x128xf32>
    %94 = arith.addf %90, %93 : vector<8x128xf32>
    %c8_i32_29 = arith.constant 8 : i32
    %95 = tpu.dynamic_rotate %88 by %c8_i32_29 dim 1 : vector<8x128xf32>, i32 -> vector<8x128xf32>
    %c152 = arith.constant 152 : index
    %c0_30 = arith.constant 0 : index
    %96 = vector.load %arg1[%c152, %c0_30] : memref<456x128xf32, #tpu.memory_space<vmem>>, vector<8x128xf32>
    %97 = arith.mulf %95, %96 : vector<8x128xf32>
    %98 = arith.addf %94, %97 : vector<8x128xf32>
    %c7_i32_31 = arith.constant 7 : i32
    %99 = tpu.dynamic_rotate %88 by %c7_i32_31 dim 1 : vector<8x128xf32>, i32 -> vector<8x128xf32>
    %c160 = arith.constant 160 : index
    %c0_32 = arith.constant 0 : index
    %100 = vector.load %arg1[%c160, %c0_32] : memref<456x128xf32, #tpu.memory_space<vmem>>, vector<8x128xf32>
    %101 = arith.mulf %99, %100 : vector<8x128xf32>
    %102 = arith.addf %98, %101 : vector<8x128xf32>
    %c1_i32_33 = arith.constant 1 : i32
    %103 = tpu.dynamic_rotate %88 by %c1_i32_33 dim 1 : vector<8x128xf32>, i32 -> vector<8x128xf32>
    %c168 = arith.constant 168 : index
    %c0_34 = arith.constant 0 : index
    %104 = vector.load %arg1[%c168, %c0_34] : memref<456x128xf32, #tpu.memory_space<vmem>>, vector<8x128xf32>
    %105 = arith.mulf %103, %104 : vector<8x128xf32>
    %106 = arith.addf %102, %105 : vector<8x128xf32>
    %c127_i32_35 = arith.constant 127 : i32
    %107 = tpu.dynamic_rotate %88 by %c127_i32_35 dim 1 : vector<8x128xf32>, i32 -> vector<8x128xf32>
    %c184 = arith.constant 184 : index
    %c0_36 = arith.constant 0 : index
    %108 = vector.load %arg1[%c184, %c0_36] : memref<456x128xf32, #tpu.memory_space<vmem>>, vector<8x128xf32>
    %109 = arith.mulf %107, %108 : vector<8x128xf32>
    %110 = arith.addf %106, %109 : vector<8x128xf32>
    %c121_i32_37 = arith.constant 121 : i32
    %111 = tpu.dynamic_rotate %88 by %c121_i32_37 dim 1 : vector<8x128xf32>, i32 -> vector<8x128xf32>
    %c192 = arith.constant 192 : index
    %c0_38 = arith.constant 0 : index
    %112 = vector.load %arg1[%c192, %c0_38] : memref<456x128xf32, #tpu.memory_space<vmem>>, vector<8x128xf32>
    %113 = arith.mulf %111, %112 : vector<8x128xf32>
    %114 = arith.addf %110, %113 : vector<8x128xf32>
    %c120_i32_39 = arith.constant 120 : i32
    %115 = tpu.dynamic_rotate %88 by %c120_i32_39 dim 1 : vector<8x128xf32>, i32 -> vector<8x128xf32>
    %c200 = arith.constant 200 : index
    %c0_40 = arith.constant 0 : index
    %116 = vector.load %arg1[%c200, %c0_40] : memref<456x128xf32, #tpu.memory_space<vmem>>, vector<8x128xf32>
    %117 = arith.mulf %115, %116 : vector<8x128xf32>
    %118 = arith.addf %114, %117 : vector<8x128xf32>
    %c119_i32_41 = arith.constant 119 : i32
    %119 = tpu.dynamic_rotate %88 by %c119_i32_41 dim 1 : vector<8x128xf32>, i32 -> vector<8x128xf32>
    %c208 = arith.constant 208 : index
    %c0_42 = arith.constant 0 : index
    %120 = vector.load %arg1[%c208, %c0_42] : memref<456x128xf32, #tpu.memory_space<vmem>>, vector<8x128xf32>
    %121 = arith.mulf %119, %120 : vector<8x128xf32>
    %122 = arith.addf %118, %121 : vector<8x128xf32>
    %c280 = arith.constant 280 : index
    %c0_43 = arith.constant 0 : index
    %123 = vector.load %arg1[%c280, %c0_43] : memref<456x128xf32, #tpu.memory_space<vmem>>, vector<8x128xf32>
    %c216 = arith.constant 216 : index
    %c0_44 = arith.constant 0 : index
    %124 = vector.load %arg1[%c216, %c0_44] : memref<456x128xf32, #tpu.memory_space<vmem>>, vector<8x128xf32>
    %125 = vector.extract_strided_slice %122 {offsets = [0, 0], sizes = [1, 128], strides = [1, 1]} : vector<8x128xf32> to vector<1x128xf32>
    %126 = vector.broadcast %125 : vector<1x128xf32> to vector<8x128xf32>
    %127 = arith.mulf %124, %126 : vector<8x128xf32>
    %128 = arith.addf %123, %127 : vector<8x128xf32>
    %c224 = arith.constant 224 : index
    %c0_45 = arith.constant 0 : index
    %129 = vector.load %arg1[%c224, %c0_45] : memref<456x128xf32, #tpu.memory_space<vmem>>, vector<8x128xf32>
    %130 = vector.extract_strided_slice %122 {offsets = [1, 0], sizes = [1, 128], strides = [1, 1]} : vector<8x128xf32> to vector<1x128xf32>
    %131 = vector.broadcast %130 : vector<1x128xf32> to vector<8x128xf32>
    %132 = arith.mulf %129, %131 : vector<8x128xf32>
    %133 = arith.addf %128, %132 : vector<8x128xf32>
    %c232 = arith.constant 232 : index
    %c0_46 = arith.constant 0 : index
    %134 = vector.load %arg1[%c232, %c0_46] : memref<456x128xf32, #tpu.memory_space<vmem>>, vector<8x128xf32>
    %135 = vector.extract_strided_slice %122 {offsets = [2, 0], sizes = [1, 128], strides = [1, 1]} : vector<8x128xf32> to vector<1x128xf32>
    %136 = vector.broadcast %135 : vector<1x128xf32> to vector<8x128xf32>
    %137 = arith.mulf %134, %136 : vector<8x128xf32>
    %138 = arith.addf %133, %137 : vector<8x128xf32>
    %c240 = arith.constant 240 : index
    %c0_47 = arith.constant 0 : index
    %139 = vector.load %arg1[%c240, %c0_47] : memref<456x128xf32, #tpu.memory_space<vmem>>, vector<8x128xf32>
    %140 = vector.extract_strided_slice %122 {offsets = [3, 0], sizes = [1, 128], strides = [1, 1]} : vector<8x128xf32> to vector<1x128xf32>
    %141 = vector.broadcast %140 : vector<1x128xf32> to vector<8x128xf32>
    %142 = arith.mulf %139, %141 : vector<8x128xf32>
    %143 = arith.addf %138, %142 : vector<8x128xf32>
    %c248 = arith.constant 248 : index
    %c0_48 = arith.constant 0 : index
    %144 = vector.load %arg1[%c248, %c0_48] : memref<456x128xf32, #tpu.memory_space<vmem>>, vector<8x128xf32>
    %145 = vector.extract_strided_slice %122 {offsets = [4, 0], sizes = [1, 128], strides = [1, 1]} : vector<8x128xf32> to vector<1x128xf32>
    %146 = vector.broadcast %145 : vector<1x128xf32> to vector<8x128xf32>
    %147 = arith.mulf %144, %146 : vector<8x128xf32>
    %148 = arith.addf %143, %147 : vector<8x128xf32>
    %c256 = arith.constant 256 : index
    %c0_49 = arith.constant 0 : index
    %149 = vector.load %arg1[%c256, %c0_49] : memref<456x128xf32, #tpu.memory_space<vmem>>, vector<8x128xf32>
    %150 = vector.extract_strided_slice %122 {offsets = [5, 0], sizes = [1, 128], strides = [1, 1]} : vector<8x128xf32> to vector<1x128xf32>
    %151 = vector.broadcast %150 : vector<1x128xf32> to vector<8x128xf32>
    %152 = arith.mulf %149, %151 : vector<8x128xf32>
    %153 = arith.addf %148, %152 : vector<8x128xf32>
    %c264 = arith.constant 264 : index
    %c0_50 = arith.constant 0 : index
    %154 = vector.load %arg1[%c264, %c0_50] : memref<456x128xf32, #tpu.memory_space<vmem>>, vector<8x128xf32>
    %155 = vector.extract_strided_slice %122 {offsets = [6, 0], sizes = [1, 128], strides = [1, 1]} : vector<8x128xf32> to vector<1x128xf32>
    %156 = vector.broadcast %155 : vector<1x128xf32> to vector<8x128xf32>
    %157 = arith.mulf %154, %156 : vector<8x128xf32>
    %158 = arith.addf %153, %157 : vector<8x128xf32>
    %c272 = arith.constant 272 : index
    %c0_51 = arith.constant 0 : index
    %159 = vector.load %arg1[%c272, %c0_51] : memref<456x128xf32, #tpu.memory_space<vmem>>, vector<8x128xf32>
    %160 = vector.extract_strided_slice %122 {offsets = [7, 0], sizes = [1, 128], strides = [1, 1]} : vector<8x128xf32> to vector<1x128xf32>
    %161 = vector.broadcast %160 : vector<1x128xf32> to vector<8x128xf32>
    %162 = arith.mulf %159, %161 : vector<8x128xf32>
    %163 = arith.addf %158, %162 : vector<8x128xf32>
    %cst_52 = arith.constant 3.000000e+00 : f32
    %164 = vector.broadcast %cst_52 : f32 to vector<8x128xf32>
    %165 = arith.addf %163, %164 : vector<8x128xf32>
    %cst_53 = arith.constant 0.000000e+00 : f32
    %cst_54 = arith.constant 6.000000e+00 : f32
    %166 = vector.broadcast %cst_53 : f32 to vector<8x128xf32>
    %167 = arith.maximumf %166, %165 : vector<8x128xf32>
    %168 = vector.broadcast %cst_54 : f32 to vector<8x128xf32>
    %169 = arith.minimumf %168, %167 : vector<8x128xf32>
    %cst_55 = arith.constant 0.166666672 : f32
    %170 = vector.broadcast %cst_55 : f32 to vector<8x128xf32>
    %171 = arith.mulf %169, %170 : vector<8x128xf32>
    %172 = arith.mulf %163, %171 : vector<8x128xf32>
    %c320 = arith.constant 320 : index
    %c0_56 = arith.constant 0 : index
    %173 = vector.load %arg1[%c320, %c0_56] : memref<456x128xf32, #tpu.memory_space<vmem>>, vector<8x128xf32>
    %174 = arith.mulf %172, %173 : vector<8x128xf32>
    %c9_i32_57 = arith.constant 9 : i32
    %175 = tpu.dynamic_rotate %172 by %c9_i32_57 dim 1 : vector<8x128xf32>, i32 -> vector<8x128xf32>
    %c288 = arith.constant 288 : index
    %c0_58 = arith.constant 0 : index
    %176 = vector.load %arg1[%c288, %c0_58] : memref<456x128xf32, #tpu.memory_space<vmem>>, vector<8x128xf32>
    %177 = arith.mulf %175, %176 : vector<8x128xf32>
    %178 = arith.addf %174, %177 : vector<8x128xf32>
    %c8_i32_59 = arith.constant 8 : i32
    %179 = tpu.dynamic_rotate %172 by %c8_i32_59 dim 1 : vector<8x128xf32>, i32 -> vector<8x128xf32>
    %c296 = arith.constant 296 : index
    %c0_60 = arith.constant 0 : index
    %180 = vector.load %arg1[%c296, %c0_60] : memref<456x128xf32, #tpu.memory_space<vmem>>, vector<8x128xf32>
    %181 = arith.mulf %179, %180 : vector<8x128xf32>
    %182 = arith.addf %178, %181 : vector<8x128xf32>
    %c7_i32_61 = arith.constant 7 : i32
    %183 = tpu.dynamic_rotate %172 by %c7_i32_61 dim 1 : vector<8x128xf32>, i32 -> vector<8x128xf32>
    %c304 = arith.constant 304 : index
    %c0_62 = arith.constant 0 : index
    %184 = vector.load %arg1[%c304, %c0_62] : memref<456x128xf32, #tpu.memory_space<vmem>>, vector<8x128xf32>
    %185 = arith.mulf %183, %184 : vector<8x128xf32>
    %186 = arith.addf %182, %185 : vector<8x128xf32>
    %c1_i32_63 = arith.constant 1 : i32
    %187 = tpu.dynamic_rotate %172 by %c1_i32_63 dim 1 : vector<8x128xf32>, i32 -> vector<8x128xf32>
    %c312 = arith.constant 312 : index
    %c0_64 = arith.constant 0 : index
    %188 = vector.load %arg1[%c312, %c0_64] : memref<456x128xf32, #tpu.memory_space<vmem>>, vector<8x128xf32>
    %189 = arith.mulf %187, %188 : vector<8x128xf32>
    %190 = arith.addf %186, %189 : vector<8x128xf32>
    %c127_i32_65 = arith.constant 127 : i32
    %191 = tpu.dynamic_rotate %172 by %c127_i32_65 dim 1 : vector<8x128xf32>, i32 -> vector<8x128xf32>
    %c328 = arith.constant 328 : index
    %c0_66 = arith.constant 0 : index
    %192 = vector.load %arg1[%c328, %c0_66] : memref<456x128xf32, #tpu.memory_space<vmem>>, vector<8x128xf32>
    %193 = arith.mulf %191, %192 : vector<8x128xf32>
    %194 = arith.addf %190, %193 : vector<8x128xf32>
    %c121_i32_67 = arith.constant 121 : i32
    %195 = tpu.dynamic_rotate %172 by %c121_i32_67 dim 1 : vector<8x128xf32>, i32 -> vector<8x128xf32>
    %c336 = arith.constant 336 : index
    %c0_68 = arith.constant 0 : index
    %196 = vector.load %arg1[%c336, %c0_68] : memref<456x128xf32, #tpu.memory_space<vmem>>, vector<8x128xf32>
    %197 = arith.mulf %195, %196 : vector<8x128xf32>
    %198 = arith.addf %194, %197 : vector<8x128xf32>
    %c120_i32_69 = arith.constant 120 : i32
    %199 = tpu.dynamic_rotate %172 by %c120_i32_69 dim 1 : vector<8x128xf32>, i32 -> vector<8x128xf32>
    %c344 = arith.constant 344 : index
    %c0_70 = arith.constant 0 : index
    %200 = vector.load %arg1[%c344, %c0_70] : memref<456x128xf32, #tpu.memory_space<vmem>>, vector<8x128xf32>
    %201 = arith.mulf %199, %200 : vector<8x128xf32>
    %202 = arith.addf %198, %201 : vector<8x128xf32>
    %c119_i32_71 = arith.constant 119 : i32
    %203 = tpu.dynamic_rotate %172 by %c119_i32_71 dim 1 : vector<8x128xf32>, i32 -> vector<8x128xf32>
    %c352 = arith.constant 352 : index
    %c0_72 = arith.constant 0 : index
    %204 = vector.load %arg1[%c352, %c0_72] : memref<456x128xf32, #tpu.memory_space<vmem>>, vector<8x128xf32>
    %205 = arith.mulf %203, %204 : vector<8x128xf32>
    %206 = arith.addf %202, %205 : vector<8x128xf32>
    %c424 = arith.constant 424 : index
    %c0_73 = arith.constant 0 : index
    %207 = vector.load %arg1[%c424, %c0_73] : memref<456x128xf32, #tpu.memory_space<vmem>>, vector<8x128xf32>
    %c360 = arith.constant 360 : index
    %c0_74 = arith.constant 0 : index
    %208 = vector.load %arg1[%c360, %c0_74] : memref<456x128xf32, #tpu.memory_space<vmem>>, vector<8x128xf32>
    %209 = vector.extract_strided_slice %206 {offsets = [0, 0], sizes = [1, 128], strides = [1, 1]} : vector<8x128xf32> to vector<1x128xf32>
    %210 = vector.broadcast %209 : vector<1x128xf32> to vector<8x128xf32>
    %211 = arith.mulf %208, %210 : vector<8x128xf32>
    %212 = arith.addf %207, %211 : vector<8x128xf32>
    %c368 = arith.constant 368 : index
    %c0_75 = arith.constant 0 : index
    %213 = vector.load %arg1[%c368, %c0_75] : memref<456x128xf32, #tpu.memory_space<vmem>>, vector<8x128xf32>
    %214 = vector.extract_strided_slice %206 {offsets = [1, 0], sizes = [1, 128], strides = [1, 1]} : vector<8x128xf32> to vector<1x128xf32>
    %215 = vector.broadcast %214 : vector<1x128xf32> to vector<8x128xf32>
    %216 = arith.mulf %213, %215 : vector<8x128xf32>
    %217 = arith.addf %212, %216 : vector<8x128xf32>
    %c376 = arith.constant 376 : index
    %c0_76 = arith.constant 0 : index
    %218 = vector.load %arg1[%c376, %c0_76] : memref<456x128xf32, #tpu.memory_space<vmem>>, vector<8x128xf32>
    %219 = vector.extract_strided_slice %206 {offsets = [2, 0], sizes = [1, 128], strides = [1, 1]} : vector<8x128xf32> to vector<1x128xf32>
    %220 = vector.broadcast %219 : vector<1x128xf32> to vector<8x128xf32>
    %221 = arith.mulf %218, %220 : vector<8x128xf32>
    %222 = arith.addf %217, %221 : vector<8x128xf32>
    %c384 = arith.constant 384 : index
    %c0_77 = arith.constant 0 : index
    %223 = vector.load %arg1[%c384, %c0_77] : memref<456x128xf32, #tpu.memory_space<vmem>>, vector<8x128xf32>
    %224 = vector.extract_strided_slice %206 {offsets = [3, 0], sizes = [1, 128], strides = [1, 1]} : vector<8x128xf32> to vector<1x128xf32>
    %225 = vector.broadcast %224 : vector<1x128xf32> to vector<8x128xf32>
    %226 = arith.mulf %223, %225 : vector<8x128xf32>
    %227 = arith.addf %222, %226 : vector<8x128xf32>
    %c392 = arith.constant 392 : index
    %c0_78 = arith.constant 0 : index
    %228 = vector.load %arg1[%c392, %c0_78] : memref<456x128xf32, #tpu.memory_space<vmem>>, vector<8x128xf32>
    %229 = vector.extract_strided_slice %206 {offsets = [4, 0], sizes = [1, 128], strides = [1, 1]} : vector<8x128xf32> to vector<1x128xf32>
    %230 = vector.broadcast %229 : vector<1x128xf32> to vector<8x128xf32>
    %231 = arith.mulf %228, %230 : vector<8x128xf32>
    %232 = arith.addf %227, %231 : vector<8x128xf32>
    %c400 = arith.constant 400 : index
    %c0_79 = arith.constant 0 : index
    %233 = vector.load %arg1[%c400, %c0_79] : memref<456x128xf32, #tpu.memory_space<vmem>>, vector<8x128xf32>
    %234 = vector.extract_strided_slice %206 {offsets = [5, 0], sizes = [1, 128], strides = [1, 1]} : vector<8x128xf32> to vector<1x128xf32>
    %235 = vector.broadcast %234 : vector<1x128xf32> to vector<8x128xf32>
    %236 = arith.mulf %233, %235 : vector<8x128xf32>
    %237 = arith.addf %232, %236 : vector<8x128xf32>
    %c408 = arith.constant 408 : index
    %c0_80 = arith.constant 0 : index
    %238 = vector.load %arg1[%c408, %c0_80] : memref<456x128xf32, #tpu.memory_space<vmem>>, vector<8x128xf32>
    %239 = vector.extract_strided_slice %206 {offsets = [6, 0], sizes = [1, 128], strides = [1, 1]} : vector<8x128xf32> to vector<1x128xf32>
    %240 = vector.broadcast %239 : vector<1x128xf32> to vector<8x128xf32>
    %241 = arith.mulf %238, %240 : vector<8x128xf32>
    %242 = arith.addf %237, %241 : vector<8x128xf32>
    %c416 = arith.constant 416 : index
    %c0_81 = arith.constant 0 : index
    %243 = vector.load %arg1[%c416, %c0_81] : memref<456x128xf32, #tpu.memory_space<vmem>>, vector<8x128xf32>
    %244 = vector.extract_strided_slice %206 {offsets = [7, 0], sizes = [1, 128], strides = [1, 1]} : vector<8x128xf32> to vector<1x128xf32>
    %245 = vector.broadcast %244 : vector<1x128xf32> to vector<8x128xf32>
    %246 = arith.mulf %243, %245 : vector<8x128xf32>
    %247 = arith.addf %242, %246 : vector<8x128xf32>
    %cst_82 = arith.constant 3.000000e+00 : f32
    %248 = vector.broadcast %cst_82 : f32 to vector<8x128xf32>
    %249 = arith.addf %247, %248 : vector<8x128xf32>
    %cst_83 = arith.constant 0.000000e+00 : f32
    %cst_84 = arith.constant 6.000000e+00 : f32
    %250 = vector.broadcast %cst_83 : f32 to vector<8x128xf32>
    %251 = arith.maximumf %250, %249 : vector<8x128xf32>
    %252 = vector.broadcast %cst_84 : f32 to vector<8x128xf32>
    %253 = arith.minimumf %252, %251 : vector<8x128xf32>
    %cst_85 = arith.constant 0.166666672 : f32
    %254 = vector.broadcast %cst_85 : f32 to vector<8x128xf32>
    %255 = arith.mulf %253, %254 : vector<8x128xf32>
    %256 = arith.mulf %247, %255 : vector<8x128xf32>
    %c432 = arith.constant 432 : index
    %c0_86 = arith.constant 0 : index
    %257 = vector.load %arg1[%c432, %c0_86] : memref<456x128xf32, #tpu.memory_space<vmem>>, vector<8x2xf32>
    %c440 = arith.constant 440 : index
    %c0_87 = arith.constant 0 : index
    %258 = vector.load %arg1[%c440, %c0_87] : memref<456x128xf32, #tpu.memory_space<vmem>>, vector<1x2xf32>
    %c448 = arith.constant 448 : index
    %c0_88 = arith.constant 0 : index
    %259 = vector.load %arg1[%c448, %c0_88] : memref<456x128xf32, #tpu.memory_space<vmem>>, vector<8x2xf32>
    %260 = vector.extract_strided_slice %256 {offsets = [0, 0], sizes = [8, 64], strides = [1, 1]} : vector<8x128xf32> to vector<8x64xf32>
    %cst_89 = arith.constant dense<0.000000e+00> : vector<8xf32>
    %261 = vector.multi_reduction <add>, %260, %cst_89 [1] : vector<8x64xf32> to vector<8xf32>
    %262 = vector.shape_cast %261 : vector<8xf32> to vector<8x1xf32>
    %cst_90 = arith.constant 1.562500e-02 : f32
    %263 = vector.broadcast %cst_90 : f32 to vector<8x1xf32>
    %264 = arith.mulf %262, %263 : vector<8x1xf32>
    %265 = vector.broadcast %264 : vector<8x1xf32> to vector<8x2xf32>
    %266 = arith.mulf %257, %265 : vector<8x2xf32>
    %cst_91 = arith.constant dense<0.000000e+00> : vector<2xf32>
    %267 = vector.multi_reduction <add>, %266, %cst_91 [0] : vector<8x2xf32> to vector<2xf32>
    %268 = vector.shape_cast %267 : vector<2xf32> to vector<1x2xf32>
    %269 = arith.addf %268, %258 : vector<1x2xf32>
    %cst_92 = arith.constant 0.000000e+00 : f32
    %270 = vector.broadcast %cst_92 : f32 to vector<1x2xf32>
    %271 = arith.maximumf %269, %270 : vector<1x2xf32>
    %272 = vector.broadcast %271 : vector<1x2xf32> to vector<8x2xf32>
    %273 = arith.mulf %259, %272 : vector<8x2xf32>
    %cst_93 = arith.constant dense<0.000000e+00> : vector<8xf32>
    %274 = vector.multi_reduction <add>, %273, %cst_93 [1] : vector<8x2xf32> to vector<8xf32>
    %275 = vector.shape_cast %274 : vector<8xf32> to vector<8x1xf32>
    %cst_94 = arith.constant 3.000000e+00 : f32
    %276 = vector.broadcast %cst_94 : f32 to vector<8x1xf32>
    %277 = arith.addf %275, %276 : vector<8x1xf32>
    %cst_95 = arith.constant 0.000000e+00 : f32
    %cst_96 = arith.constant 6.000000e+00 : f32
    %278 = vector.broadcast %cst_95 : f32 to vector<8x1xf32>
    %279 = arith.maximumf %278, %277 : vector<8x1xf32>
    %280 = vector.broadcast %cst_96 : f32 to vector<8x1xf32>
    %281 = arith.minimumf %280, %279 : vector<8x1xf32>
    %cst_97 = arith.constant 0.166666672 : f32
    %282 = vector.broadcast %cst_97 : f32 to vector<8x1xf32>
    %283 = arith.mulf %281, %282 : vector<8x1xf32>
    %c0_98 = arith.constant 0 : index
    %c0_99 = arith.constant 0 : index
    %c0_100 = arith.constant 0 : index
    %284 = vector.load %arg0[%c0_98, %c0_99, %c0_100] : memref<2x8x128xf32, #tpu.memory_space<vmem>>, vector<1x8x64xf32>
    %285 = vector.shape_cast %284 : vector<1x8x64xf32> to vector<8x64xf32>
    %c0_101 = arith.constant 0 : index
    %c0_102 = arith.constant 0 : index
    %c0_103 = arith.constant 0 : index
    %286 = vector.load %arg2[%c0_101, %c0_102, %c0_103] : memref<2x16x64xf32, #tpu.memory_space<vmem>>, vector<1x8x64xf32>
    %287 = vector.shape_cast %286 : vector<1x8x64xf32> to vector<8x64xf32>
    %288 = vector.shape_cast %285 : vector<8x64xf32> to vector<1x8x64xf32>
    tpu.vector_store %arg2[%c0_101, %c0_102, %c0_103], %288 {strides = array<i32>} : memref<2x16x64xf32, #tpu.memory_space<vmem>>, vector<1x8x64xf32>,
    %289 = vector.broadcast %283 : vector<8x1xf32> to vector<8x64xf32>
    %290 = arith.mulf %260, %289 : vector<8x64xf32>
    %c0_104 = arith.constant 0 : index
    %c8_105 = arith.constant 8 : index
    %c0_106 = arith.constant 0 : index
    %291 = vector.load %arg2[%c0_104, %c8_105, %c0_106] : memref<2x16x64xf32, #tpu.memory_space<vmem>>, vector<1x8x64xf32>
    %292 = vector.shape_cast %291 : vector<1x8x64xf32> to vector<8x64xf32>
    %293 = vector.shape_cast %290 : vector<8x64xf32> to vector<1x8x64xf32>
    tpu.vector_store %arg2[%c0_104, %c8_105, %c0_106], %293 {strides = array<i32>} : memref<2x16x64xf32, #tpu.memory_space<vmem>>, vector<1x8x64xf32>,
    %294 = vector.extract_strided_slice %256 {offsets = [0, 64], sizes = [8, 64], strides = [1, 1]} : vector<8x128xf32> to vector<8x64xf32>
    %cst_107 = arith.constant dense<0.000000e+00> : vector<8xf32>
    %295 = vector.multi_reduction <add>, %294, %cst_107 [1] : vector<8x64xf32> to vector<8xf32>
    %296 = vector.shape_cast %295 : vector<8xf32> to vector<8x1xf32>
    %cst_108 = arith.constant 1.562500e-02 : f32
    %297 = vector.broadcast %cst_108 : f32 to vector<8x1xf32>
    %298 = arith.mulf %296, %297 : vector<8x1xf32>
    %299 = vector.broadcast %298 : vector<8x1xf32> to vector<8x2xf32>
    %300 = arith.mulf %257, %299 : vector<8x2xf32>
    %cst_109 = arith.constant dense<0.000000e+00> : vector<2xf32>
    %301 = vector.multi_reduction <add>, %300, %cst_109 [0] : vector<8x2xf32> to vector<2xf32>
    %302 = vector.shape_cast %301 : vector<2xf32> to vector<1x2xf32>
    %303 = arith.addf %302, %258 : vector<1x2xf32>
    %cst_110 = arith.constant 0.000000e+00 : f32
    %304 = vector.broadcast %cst_110 : f32 to vector<1x2xf32>
    %305 = arith.maximumf %303, %304 : vector<1x2xf32>
    %306 = vector.broadcast %305 : vector<1x2xf32> to vector<8x2xf32>
    %307 = arith.mulf %259, %306 : vector<8x2xf32>
    %cst_111 = arith.constant dense<0.000000e+00> : vector<8xf32>
    %308 = vector.multi_reduction <add>, %307, %cst_111 [1] : vector<8x2xf32> to vector<8xf32>
    %309 = vector.shape_cast %308 : vector<8xf32> to vector<8x1xf32>
    %cst_112 = arith.constant 3.000000e+00 : f32
    %310 = vector.broadcast %cst_112 : f32 to vector<8x1xf32>
    %311 = arith.addf %309, %310 : vector<8x1xf32>
    %cst_113 = arith.constant 0.000000e+00 : f32
    %cst_114 = arith.constant 6.000000e+00 : f32
    %312 = vector.broadcast %cst_113 : f32 to vector<8x1xf32>
    %313 = arith.maximumf %312, %311 : vector<8x1xf32>
    %314 = vector.broadcast %cst_114 : f32 to vector<8x1xf32>
    %315 = arith.minimumf %314, %313 : vector<8x1xf32>
    %cst_115 = arith.constant 0.166666672 : f32
    %316 = vector.broadcast %cst_115 : f32 to vector<8x1xf32>
    %317 = arith.mulf %315, %316 : vector<8x1xf32>
    %c1_116 = arith.constant 1 : index
    %c0_117 = arith.constant 0 : index
    %c0_118 = arith.constant 0 : index
    %318 = vector.load %arg0[%c1_116, %c0_117, %c0_118] : memref<2x8x128xf32, #tpu.memory_space<vmem>>, vector<1x8x64xf32>
    %319 = vector.shape_cast %318 : vector<1x8x64xf32> to vector<8x64xf32>
    %c1_119 = arith.constant 1 : index
    %c0_120 = arith.constant 0 : index
    %c0_121 = arith.constant 0 : index
    %320 = vector.load %arg2[%c1_119, %c0_120, %c0_121] : memref<2x16x64xf32, #tpu.memory_space<vmem>>, vector<1x8x64xf32>
    %321 = vector.shape_cast %320 : vector<1x8x64xf32> to vector<8x64xf32>
    %322 = vector.shape_cast %319 : vector<8x64xf32> to vector<1x8x64xf32>
    tpu.vector_store %arg2[%c1_119, %c0_120, %c0_121], %322 {strides = array<i32>} : memref<2x16x64xf32, #tpu.memory_space<vmem>>, vector<1x8x64xf32>,
    %323 = vector.broadcast %317 : vector<8x1xf32> to vector<8x64xf32>
    %324 = arith.mulf %294, %323 : vector<8x64xf32>
    %c1_122 = arith.constant 1 : index
    %c8_123 = arith.constant 8 : index
    %c0_124 = arith.constant 0 : index
    %325 = vector.load %arg2[%c1_122, %c8_123, %c0_124] : memref<2x16x64xf32, #tpu.memory_space<vmem>>, vector<1x8x64xf32>
    %326 = vector.shape_cast %325 : vector<1x8x64xf32> to vector<8x64xf32>
    %327 = vector.shape_cast %324 : vector<8x64xf32> to vector<1x8x64xf32>
    tpu.vector_store %arg2[%c1_122, %c8_123, %c0_124], %327 {strides = array<i32>} : memref<2x16x64xf32, #tpu.memory_space<vmem>>, vector<1x8x64xf32>,
    return
  }
}

</mosaic_0001>

<llo_original>
// kernel: _lambda_.1
$region0: #{_lambda_.1}
  #allocation0 [shape = 'u32[]', space=smem, size = 0x4, offset = 0x4, fixed_abs, tag = 'smem constant byte address 0x4 - core index']
  #allocation1 [shape = 'u32[72,128]{1,0:T(1,128)}', space=vmem, size = 0x9000, scoped, tag = 'internal scratch']
  %s0 = inlined_call_operand.vmem [shape: f32[2,8,128], index: 0, kind: input, shape index: {}]
  %s1 = inlined_call_operand.vmem [shape: f32[456,128], index: 1, kind: input, shape index: {}]
  %s2 = inlined_call_operand.vmem [shape: f32[2,16,64], index: 2, kind: output, shape index: {}]
  %s3 = sld [smem:[#allocation0]]
  $region18: #{_lambda_.1} parent=0
    _
  %s5 = ssub.s32 1, %s3
  %s6 = scalar_select 0, %s5, %s3
  // Predicated region
  $region2: #{_lambda_.1} parent=0 // pred_check
    _
  $region3: #{_lambda_.1} parent=0 // pred_check_branch
    %8 = sbr.rel (0) target = $region5
  $region4: #{_lambda_.1} parent=0 // pred_region
    _
  $region5: #{_lambda_.1} parent=0 // pred_fallthru
    _
  // Predicated region
  $region6: #{_lambda_.1} parent=0 // pred_check
    _
  $region7: #{_lambda_.1} parent=0 // pred_check_branch
    %10 = sbr.rel (0) target = $region9
  $region8: #{_lambda_.1} parent=0 // pred_region
    _
  $region9: #{_lambda_.1} parent=0 // pred_fallthru
    _
  %v11 = vld [vmem:[%s0] sm:$0xff]
  %s12 = scalar_lea.vmem %s0, 8
  %v13 = vld [vmem:[%s12] sm:$0xff]
  %15 = vrot.lane.b32.xlu0 %v11, 64
  %v16 = vpop.permute.xlu0 %15
  %vm18 = vcmask 523264
  %v19 = vsel %vm18, %v16, %v13
  %v20 = vld [vmem:[%s1 + $0x20] sm:$0xff]
  %v21 = vmul.f32 %v19, %v20
  %22 = vrot.lane.b32.xlu0 %v19, 9
  %v23 = vpop.permute.xlu0 %22
  %v24 = vld [vmem:[%s1] sm:$0xff]
  %v25 = vmul.f32 %v23, %v24
  %v26 = vadd.f32 %v21, %v25
  %27 = vrot.lane.b32.xlu0 %v19, 8
  %v28 = vpop.permute.xlu0 %27
  %v29 = vld [vmem:[%s1 + $0x8] sm:$0xff]
  %v30 = vmul.f32 %v28, %v29
  %v31 = vadd.f32 %v26, %v30
  %32 = vrot.lane.b32.xlu0 %v19, 7
  %v33 = vpop.permute.xlu0 %32
  %v34 = vld [vmem:[%s1 + $0x10] sm:$0xff]
  %v35 = vmul.f32 %v33, %v34
  %v36 = vadd.f32 %v31, %v35
  %37 = vrot.lane.b32.xlu0 %v19, 1
  %v38 = vpop.permute.xlu0 %37
  %v39 = vld [vmem:[%s1 + $0x18] sm:$0xff]
  %v40 = vmul.f32 %v38, %v39
  %v41 = vadd.f32 %v36, %v40
  %42 = vrot.lane.b32.xlu0 %v19, 127
  %v43 = vpop.permute.xlu0 %42
  %v44 = vld [vmem:[%s1 + $0x28] sm:$0xff]
  %v45 = vmul.f32 %v43, %v44
  %v46 = vadd.f32 %v41, %v45
  %47 = vrot.lane.b32.xlu0 %v19, 121
  %v48 = vpop.permute.xlu0 %47
  %v49 = vld [vmem:[%s1 + $0x30] sm:$0xff]
  %v50 = vmul.f32 %v48, %v49
  %v51 = vadd.f32 %v46, %v50
  %52 = vrot.lane.b32.xlu0 %v19, 120
  %v53 = vpop.permute.xlu0 %52
  %v54 = vld [vmem:[%s1 + $0x38] sm:$0xff]
  %v55 = vmul.f32 %v53, %v54
  %v56 = vadd.f32 %v51, %v55
  %57 = vrot.lane.b32.xlu0 %v19, 119
  %v58 = vpop.permute.xlu0 %57
  %v59 = vld [vmem:[%s1 + $0x40] sm:$0xff]
  %v60 = vmul.f32 %v58, %v59
  %v61 = vadd.f32 %v56, %v60
  %v62 = vld [vmem:[%s1 + $0x88] sm:$0xff]
  %v63 = vld [vmem:[%s1 + $0x48] sm:$0xff]
  %v64 = vperm.slane %v61, 0
  %v65 = vmul.f32 %v63, %v64
  %v66 = vadd.f32 %v62, %v65
  %v67 = vld [vmem:[%s1 + $0x50] sm:$0xff]
  %v68 = vperm.slane %v61, 1
  %v69 = vmul.f32 %v67, %v68
  %v70 = vadd.f32 %v66, %v69
  %v71 = vld [vmem:[%s1 + $0x58] sm:$0xff]
  %v72 = vperm.slane %v61, 2
  %v73 = vmul.f32 %v71, %v72
  %v74 = vadd.f32 %v70, %v73
  %v75 = vld [vmem:[%s1 + $0x60] sm:$0xff]
  %v76 = vperm.slane %v61, 3
  %v77 = vmul.f32 %v75, %v76
  %v78 = vadd.f32 %v74, %v77
  %v79 = vld [vmem:[%s1 + $0x68] sm:$0xff]
  %v80 = vperm.slane %v61, 4
  %v81 = vmul.f32 %v79, %v80
  %v82 = vadd.f32 %v78, %v81
  %v83 = vld [vmem:[%s1 + $0x70] sm:$0xff]
  %v84 = vperm.slane %v61, 5
  %v85 = vmul.f32 %v83, %v84
  %v86 = vadd.f32 %v82, %v85
  %v87 = vld [vmem:[%s1 + $0x78] sm:$0xff]
  %v88 = vperm.slane %v61, 6
  %v89 = vmul.f32 %v87, %v88
  %v90 = vadd.f32 %v86, %v89
  %v91 = vld [vmem:[%s1 + $0x80] sm:$0xff]
  %v92 = vperm.slane %v61, 7
  %v93 = vmul.f32 %v91, %v92
  %v94 = vadd.f32 %v90, %v93
  %v95 = vadd.f32 %v94, 3.0
  %v96 = vmax.f32 %v95, 0.0
  %v97 = vmin.f32 %v96, 6.0
  %v98 = vmul.f32 %v97, 0.16666667
  %v99 = vmul.f32 %v94, %v98
  %v100 = vld [vmem:[%s1 + $0xb0] sm:$0xff]
  %v101 = vmul.f32 %v99, %v100
  %102 = vrot.lane.b32.xlu0 %v99, 9
  %v103 = vpop.permute.xlu0 %102
  %v104 = vld [vmem:[%s1 + $0x90] sm:$0xff]
  %v105 = vmul.f32 %v103, %v104
  %v106 = vadd.f32 %v101, %v105
  %107 = vrot.lane.b32.xlu0 %v99, 8
  %v108 = vpop.permute.xlu0 %107
  %v109 = vld [vmem:[%s1 + $0x98] sm:$0xff]
  %v110 = vmul.f32 %v108, %v109
  %v111 = vadd.f32 %v106, %v110
  %112 = vrot.lane.b32.xlu0 %v99, 7
  %v113 = vpop.permute.xlu0 %112
  %v114 = vld [vmem:[%s1 + $0xa0] sm:$0xff]
  %v115 = vmul.f32 %v113, %v114
  %v116 = vadd.f32 %v111, %v115
  %117 = vrot.lane.b32.xlu0 %v99, 1
  %v118 = vpop.permute.xlu0 %117
  %v119 = vld [vmem:[%s1 + $0xa8] sm:$0xff]
  %v120 = vmul.f32 %v118, %v119
  %v121 = vadd.f32 %v116, %v120
  %122 = vrot.lane.b32.xlu0 %v99, 127
  %v123 = vpop.permute.xlu0 %122
  %v124 = vld [vmem:[%s1 + $0xb8] sm:$0xff]
  %v125 = vmul.f32 %v123, %v124
  %v126 = vadd.f32 %v121, %v125
  %127 = vrot.lane.b32.xlu0 %v99, 121
  %v128 = vpop.permute.xlu0 %127
  %v129 = vld [vmem:[%s1 + $0xc0] sm:$0xff]
  %v130 = vmul.f32 %v128, %v129
  %v131 = vadd.f32 %v126, %v130
  %132 = vrot.lane.b32.xlu0 %v99, 120
  %v133 = vpop.permute.xlu0 %132
  %v134 = vld [vmem:[%s1 + $0xc8] sm:$0xff]
  %v135 = vmul.f32 %v133, %v134
  %v136 = vadd.f32 %v131, %v135
  %137 = vrot.lane.b32.xlu0 %v99, 119
  %v138 = vpop.permute.xlu0 %137
  %v139 = vld [vmem:[%s1 + $0xd0] sm:$0xff]
  %v140 = vmul.f32 %v138, %v139
  %v141 = vadd.f32 %v136, %v140
  %v142 = vld [vmem:[%s1 + $0x118] sm:$0xff]
  %v143 = vld [vmem:[%s1 + $0xd8] sm:$0xff]
  %v144 = vperm.slane %v141, 0
  %v145 = vmul.f32 %v143, %v144
  %v146 = vadd.f32 %v142, %v145
  %v147 = vld [vmem:[%s1 + $0xe0] sm:$0xff]
  %v148 = vperm.slane %v141, 1
  %v149 = vmul.f32 %v147, %v148
  %v150 = vadd.f32 %v146, %v149
  %v151 = vld [vmem:[%s1 + $0xe8] sm:$0xff]
  %v152 = vperm.slane %v141, 2
  %v153 = vmul.f32 %v151, %v152
  %v154 = vadd.f32 %v150, %v153
  %v155 = vld [vmem:[%s1 + $0xf0] sm:$0xff]
  %v156 = vperm.slane %v141, 3
  %v157 = vmul.f32 %v155, %v156
  %v158 = vadd.f32 %v154, %v157
  %v159 = vld [vmem:[%s1 + $0xf8] sm:$0xff]
  %v160 = vperm.slane %v141, 4
  %v161 = vmul.f32 %v159, %v160
  %v162 = vadd.f32 %v158, %v161
  %v163 = vld [vmem:[%s1 + $0x100] sm:$0xff]
  %v164 = vperm.slane %v141, 5
  %v165 = vmul.f32 %v163, %v164
  %v166 = vadd.f32 %v162, %v165
  %v167 = vld [vmem:[%s1 + $0x108] sm:$0xff]
  %v168 = vperm.slane %v141, 6
  %v169 = vmul.f32 %v167, %v168
  %v170 = vadd.f32 %v166, %v169
  %v171 = vld [vmem:[%s1 + $0x110] sm:$0xff]
  %v172 = vperm.slane %v141, 7
  %v173 = vmul.f32 %v171, %v172
  %v174 = vadd.f32 %v170, %v173
  %v175 = vadd.f32 %v174, 3.0
  %v176 = vmax.f32 %v175, 0.0
  %v177 = vmin.f32 %v176, 6.0
  %v178 = vmul.f32 %v177, 0.16666667
  %v179 = vmul.f32 %v174, %v178
  %v180 = vld [vmem:[%s1 + $0x140] sm:$0xff]
  %v181 = vmul.f32 %v179, %v180
  %182 = vrot.lane.b32.xlu0 %v179, 9
  %v183 = vpop.permute.xlu0 %182
  %v184 = vld [vmem:[%s1 + $0x120] sm:$0xff]
  %v185 = vmul.f32 %v183, %v184
  %v186 = vadd.f32 %v181, %v185
  %187 = vrot.lane.b32.xlu0 %v179, 8
  %v188 = vpop.permute.xlu0 %187
  %v189 = vld [vmem:[%s1 + $0x128] sm:$0xff]
  %v190 = vmul.f32 %v188, %v189
  %v191 = vadd.f32 %v186, %v190
  %192 = vrot.lane.b32.xlu0 %v179, 7
  %v193 = vpop.permute.xlu0 %192
  %v194 = vld [vmem:[%s1 + $0x130] sm:$0xff]
  %v195 = vmul.f32 %v193, %v194
  %v196 = vadd.f32 %v191, %v195
  %197 = vrot.lane.b32.xlu0 %v179, 1
  %v198 = vpop.permute.xlu0 %197
  %v199 = vld [vmem:[%s1 + $0x138] sm:$0xff]
  %v200 = vmul.f32 %v198, %v199
  %v201 = vadd.f32 %v196, %v200
  %202 = vrot.lane.b32.xlu0 %v179, 127
  %v203 = vpop.permute.xlu0 %202
  %v204 = vld [vmem:[%s1 + $0x148] sm:$0xff]
  %v205 = vmul.f32 %v203, %v204
  %v206 = vadd.f32 %v201, %v205
  %207 = vrot.lane.b32.xlu0 %v179, 121
  %v208 = vpop.permute.xlu0 %207
  %v209 = vld [vmem:[%s1 + $0x150] sm:$0xff]
  %v210 = vmul.f32 %v208, %v209
  %v211 = vadd.f32 %v206, %v210
  %212 = vrot.lane.b32.xlu0 %v179, 120
  %v213 = vpop.permute.xlu0 %212
  %v214 = vld [vmem:[%s1 + $0x158] sm:$0xff]
  %v215 = vmul.f32 %v213, %v214
  %v216 = vadd.f32 %v211, %v215
  %217 = vrot.lane.b32.xlu0 %v179, 119
  %v218 = vpop.permute.xlu0 %217
  %v219 = vld [vmem:[%s1 + $0x160] sm:$0xff]
  %v220 = vmul.f32 %v218, %v219
  %v221 = vadd.f32 %v216, %v220
  %v222 = vld [vmem:[%s1 + $0x1a8] sm:$0xff]
  %v223 = vld [vmem:[%s1 + $0x168] sm:$0xff]
  %v224 = vperm.slane %v221, 0
  %v225 = vmul.f32 %v223, %v224
  %v226 = vadd.f32 %v222, %v225
  %v227 = vld [vmem:[%s1 + $0x170] sm:$0xff]
  %v228 = vperm.slane %v221, 1
  %v229 = vmul.f32 %v227, %v228
  %v230 = vadd.f32 %v226, %v229
  %v231 = vld [vmem:[%s1 + $0x178] sm:$0xff]
  %v232 = vperm.slane %v221, 2
  %v233 = vmul.f32 %v231, %v232
  %v234 = vadd.f32 %v230, %v233
  %v235 = vld [vmem:[%s1 + $0x180] sm:$0xff]
  %v236 = vperm.slane %v221, 3
  %v237 = vmul.f32 %v235, %v236
  %v238 = vadd.f32 %v234, %v237
  %v239 = vld [vmem:[%s1 + $0x188] sm:$0xff]
  %v240 = vperm.slane %v221, 4
  %v241 = vmul.f32 %v239, %v240
  %v242 = vadd.f32 %v238, %v241
  %v243 = vld [vmem:[%s1 + $0x190] sm:$0xff]
  %v244 = vperm.slane %v221, 5
  %v245 = vmul.f32 %v243, %v244
  %v246 = vadd.f32 %v242, %v245
  %v247 = vld [vmem:[%s1 + $0x198] sm:$0xff]
  %v248 = vperm.slane %v221, 6
  %v249 = vmul.f32 %v247, %v248
  %v250 = vadd.f32 %v246, %v249
  %v251 = vld [vmem:[%s1 + $0x1a0] sm:$0xff]
  %v252 = vperm.slane %v221, 7
  %v253 = vmul.f32 %v251, %v252
  %v254 = vadd.f32 %v250, %v253
  %v255 = vadd.f32 %v254, 3.0
  %v256 = vmax.f32 %v255, 0.0
  %v257 = vmin.f32 %v256, 6.0
  %v258 = vmul.f32 %v257, 0.16666667
  %v259 = vmul.f32 %v254, %v258
  %v260 = vld [vmem:[%s1 + $0x1b0] sm:$0xff]
  %v261 = vld [vmem:[%s1 + $0x1b8] sm:$0x1]
  %v262 = vld [vmem:[%s1 + $0x1c0] sm:$0xff]
  %v263 = vsel %vm18, %v259, 0.0
  %264 = vadd.xlane.f32.xlu0 %v263
  %v265 = vpop.xlane.xlu0 %264
  %v266 = vmul.f32 %v265, 0.015625
  %v267 = vmul.f32 %v260, %v266
  %vm268 = vcmask 15360
  %v269 = vsel %vm268, %v267, 0.0
  %v270 = vrot.slane %v269, 4
  %v271 = vadd.f32 %v269, %v270
  %v272 = vrot.slane %v271, 2
  %v273 = vadd.f32 %v271, %v272
  %v274 = vrot.slane %v273, 1
  %v275 = vadd.f32 %v273, %v274
  %v276 = vadd.f32 %v275, %v261
  %v277 = vmax.f32 %v276, 0.0
  %v278 = vperm.slane %v277, 0
  %v279 = vmul.f32 %v262, %v278
  %v280 = vsel %vm268, %v279, 0.0
  %281 = vadd.xlane.f32.xlu0 %v280
  %v282 = vpop.xlane.xlu0 %281
  %v283 = vadd.f32 %v282, 3.0
  %v284 = vmax.f32 %v283, 0.0
  %v285 = vmin.f32 %v284, 6.0
  %v286 = vmul.f32 %v285, 0.16666667
  %287 = vst.msk [vmem:[%s2] sm:$0xff] %vm18, %v11
  %v288 = vmul.f32 %v259, %v286
  %289 = vst.msk [vmem:[%s2 + $0x8] sm:$0xff] %vm18, %v288
  %291 = vrot.lane.b32.xlu0 %v259, 64
  %v292 = vpop.permute.xlu0 %291
  %v294 = vsel %vm18, %v292, 0.0
  %295 = vadd.xlane.f32.xlu0 %v294
  %v296 = vpop.xlane.xlu0 %295
  %v297 = vmul.f32 %v296, 0.015625
  %v298 = vmul.f32 %v260, %v297
  %v299 = vsel %vm268, %v298, 0.0
  %v300 = vrot.slane %v299, 4
  %v301 = vadd.f32 %v299, %v300
  %v302 = vrot.slane %v301, 2
  %v303 = vadd.f32 %v301, %v302
  %v304 = vrot.slane %v303, 1
  %v305 = vadd.f32 %v303, %v304
  %v306 = vadd.f32 %v305, %v261
  %v307 = vmax.f32 %v306, 0.0
  %v308 = vperm.slane %v307, 0
  %v309 = vmul.f32 %v262, %v308
  %v310 = vsel %vm268, %v309, 0.0
  %311 = vadd.xlane.f32.xlu0 %v310
  %v312 = vpop.xlane.xlu0 %311
  %v313 = vadd.f32 %v312, 3.0
  %v314 = vmax.f32 %v313, 0.0
  %v315 = vmin.f32 %v314, 6.0
  %v316 = vmul.f32 %v315, 0.16666667
  %v317 = vld [vmem:[%s12] sm:$0xff]
  %s318 = scalar_lea.vmem %s2, 16
  %319 = vst.msk [vmem:[%s318] sm:$0xff] %vm18, %v317
  %v320 = vmul.f32 %v259, %v316
  %322 = vrot.lane.b32.xlu0 %v320, 64
  %v323 = vpop.permute.xlu0 %322
  %325 = vst.msk [vmem:[%s318 + $0x8] sm:$0xff] %vm18, %v323
  // Predicated region
  $region10: #{_lambda_.1} parent=0 // pred_check
    _
  $region11: #{_lambda_.1} parent=0 // pred_check_branch
    %327 = sbr.rel (0) target = $region13
  $region12: #{_lambda_.1} parent=0 // pred_region
    _
  $region13: #{_lambda_.1} parent=0 // pred_fallthru
    _
  // Predicated region
  $region14: #{_lambda_.1} parent=0 // pred_check
    _
  $region15: #{_lambda_.1} parent=0 // pred_check_branch
    %329 = sbr.rel (0) target = $region17
  $region16: #{_lambda_.1} parent=0 // pred_region
    _
  $region17: #{_lambda_.1} parent=0 // pred_fallthru
    _

</llo_original>
